<compile_context>
chip_gen: v7x
topology: tpu7x:2x2x1
jax: 0.10.0
libtpu: 0.0.40
codegen_flags: <defaults>
</compile_context>

<pallas_src>
import functools

import jax
import jax.numpy as jnp
import numpy as np
from jax.experimental import pallas as pl
from jax.experimental.pallas import tpu as pltpu

_LANE = 128
_SUBLANE = 8


def _round_up(x, m):
    return -(-x // m) * m


def encoder_kernel(data_ref, len_ref,
                   w1_ref, b1_ref, w2_ref, b2_ref, w3_ref, b3_ref,
                   out_ref):
    # data_ref: (tile_r, dp) bf16        len_ref: (tile_b, 1) int32
    # w1: (dp, nhp) bf16  w2/w3: (nhp, nhp) bf16  b*: (1, nhp) f32  (all resident)
    # out_ref: (tile_b, nhp) f32
    tile_b, nhp = out_ref.shape
    tile_r = data_ref.shape[0]
    maxl_p = tile_r // tile_b

    # 3-layer MLP: bf16 MXU matmuls, f32 accumulation; bias/ReLU in f32.
    h = jnp.dot(data_ref[...], w1_ref[...],
                preferred_element_type=jnp.float32) + b1_ref[...]
    h = jnp.maximum(h, 0.0)
    h = jnp.dot(h.astype(jnp.bfloat16), w2_ref[...],
                preferred_element_type=jnp.float32) + b2_ref[...]
    h = jnp.maximum(h, 0.0)
    h = jnp.dot(h.astype(jnp.bfloat16), w3_ref[...],
                preferred_element_type=jnp.float32) + b3_ref[...]

    # Build the padding mask in-kernel from per-sample lengths (VPU iota+compare;
    # no (rows,1) mask DMA).  Padded samples have length 0 -> all-zero output.
    lens = len_ref[...]                                          # (tile_b, 1) int32
    pos = jax.lax.broadcasted_iota(jnp.int32, (tile_b, maxl_p, 1), 1)
    mask = (pos < lens[:, :, None]).astype(jnp.float32)          # (tile_b, maxl_p, 1)

    # Masked pooling: reshape splits the sublane dim only (maxl_p % 8 == 0).
    pooled = jnp.sum(h.reshape(tile_b, maxl_p, nhp) * mask, axis=1)   # (tile_b, nhp)

    # mask.sum(1) == length exactly, so divide by (length + 1e-6) directly.
    inv = pl.reciprocal(lens.astype(jnp.float32) + 1e-6)         # (tile_b, 1)
    out_ref[...] = pooled * inv


def _vmem_limit_bytes(tile_b, maxl_p, dp, nhp):
    """Explicit per-tile VMEM budget (double-buffered I/O + live f32 intermediates)."""
    tile_r = tile_b * maxl_p
    data_in = 2 * tile_r * dp * 2                      # bf16 activation tile, x2 buffers
    len_in = 2 * tile_b * _LANE * 4                    # int32 lengths, lane-padded, x2
    weights = 2 * ((dp + 2 * nhp) * nhp * 2 + 3 * nhp * 4)   # bf16 W + f32 b, x2 buffers
    out_buf = 2 * tile_b * nhp * 4                     # f32 output tile, x2 buffers
    live = 3 * tile_r * nhp * 4                        # ~3 live f32 intermediates
    budget = data_in + len_in + weights + out_buf + live
    return int(min(max(2 * budget, 16 * 2**20), 48 * 2**20))


@functools.partial(jax.jit, static_argnames=("bp", "maxl_p", "tile_b"))
def encoder_pallas(data2d, lengths, w1, b1, w2, b2, w3, b3, *, bp, maxl_p, tile_b):
    dp = w1.shape[0]
    nhp = w1.shape[1]
    tile_r = tile_b * maxl_p
    grid = (bp // tile_b,)
    const2 = lambda i: (0, 0)

    return pl.pallas_call(
        encoder_kernel,
        out_shape=jax.ShapeDtypeStruct((bp, nhp), jnp.float32),
        grid_spec=pltpu.PrefetchScalarGridSpec(
            num_scalar_prefetch=0,
            grid=grid,
            in_specs=[
                pl.BlockSpec((tile_r, dp), lambda i: (i, 0)),   # activations (bf16)
                pl.BlockSpec((tile_b, 1), lambda i: (i, 0)),    # per-sample lengths
                pl.BlockSpec((dp, nhp), const2),                # w1 (resident)
                pl.BlockSpec((1, nhp), const2),                 # b1
                pl.BlockSpec((nhp, nhp), const2),               # w2
                pl.BlockSpec((1, nhp), const2),                 # b2
                pl.BlockSpec((nhp, nhp), const2),               # w3
                pl.BlockSpec((1, nhp), const2),                 # b3
            ],
            out_specs=pl.BlockSpec((tile_b, nhp), lambda i: (i, 0)),
        ),
        compiler_params=pltpu.CompilerParams(
            dimension_semantics=("parallel",),
            vmem_limit_bytes=_vmem_limit_bytes(tile_b, maxl_p, dp, nhp),
        ),
    )(data2d, lengths, w1, b1, w2, b2, w3, b3)


def _pad_cast(a, rows, cols, dtype):
    a = np.asarray(a, np.float32)
    out = np.zeros((rows, cols), np.float32)
    out[: a.shape[0], : a.shape[1]] = a
    return jnp.asarray(out.astype(dtype))


def _choose_tile_b(batch, maxl_p, target_rows=2048, max_rows=4096):
    # target ~2048 rows per tile (amortize per-step overhead), cap tile_r for VMEM.
    tile_b = max(_SUBLANE, (target_rows // maxl_p) // _SUBLANE * _SUBLANE)
    tile_b = max(_SUBLANE, min(tile_b, (max_rows // maxl_p) // _SUBLANE * _SUBLANE))
    b8 = _round_up(batch, _SUBLANE)
    tile_b = min(tile_b, b8)                     # never pad beyond one batch tile
    if b8 >= 2 * _SUBLANE:                       # keep >=2 grid steps (v7x: 2 TCs)
        tile_b = min(tile_b, max(_SUBLANE, (b8 // 2) // _SUBLANE * _SUBLANE))
    return tile_b


def encoder_forward(fvs, params, *, tile_b=None):
    """fvs: list of (l_i, ninput) float32 arrays. Returns (batch, nh) float32."""
    w1, b1, w2, b2, w3, b3 = params
    ninput, nh = w1.shape
    batch = len(fvs)
    maxl = max(int(x.shape[0]) for x in fvs)

    # padded geometry: features -> sublane multiple only (no 128-lane inflation),
    # hidden -> 128 lanes (lane-dense output), sequence -> multiple of 8 sublanes.
    dp = _round_up(ninput, _SUBLANE)
    nhp = _round_up(nh, _LANE)
    maxl_p = _round_up(maxl, _SUBLANE)
    if tile_b is None:
        tile_b = _choose_tile_b(batch, maxl_p)
    bp = _round_up(batch, tile_b)

    # host glue: ragged pack at native width, cast to bf16 before transfer
    data = np.zeros((bp, maxl_p, dp), dtype=np.float32)
    lengths = np.zeros((bp, 1), dtype=np.int32)
    for i, x in enumerate(fvs):
        l = int(x.shape[0])
        data[i, :l, :ninput] = np.asarray(x)
        lengths[i, 0] = l
    data2d = jnp.asarray(data.reshape(bp * maxl_p, dp).astype(jnp.bfloat16))
    lengths = jnp.asarray(lengths)

    # weights: bf16, lane-padded hidden dim (zero rows/cols are numerically inert)
    w1p = _pad_cast(w1, dp, nhp, jnp.bfloat16)
    b1p = _pad_cast(b1, 1, nhp, jnp.float32)
    w2p = _pad_cast(w2, nhp, nhp, jnp.bfloat16)
    b2p = _pad_cast(b2, 1, nhp, jnp.float32)
    w3p = _pad_cast(w3, nhp, nhp, jnp.bfloat16)
    b3p = _pad_cast(b3, 1, nhp, jnp.float32)

    out = encoder_pallas(data2d, lengths, w1p, b1p, w2p, b2p, w3p, b3p,
                         bp=bp, maxl_p=maxl_p, tile_b=tile_b)
    return out[:batch, :nh]


def encoder_reference(fvs, params):
    """Pure-JAX f32 reference matching the PyTorch forward."""
    w1, b1, w2, b2, w3, b3 = params
    ninput = w1.shape[0]
    batch = len(fvs)
    maxl = max(int(x.shape[0]) for x in fvs)
    data = np.zeros((batch, maxl, ninput), dtype=np.float32)
    mask = np.zeros((batch, maxl, 1), dtype=np.float32)
    for i, x in enumerate(fvs):
        l = int(x.shape[0])
        data[i, :l, :] = np.asarray(x)
        mask[i, :l] = 1.0
    data = jnp.asarray(data)
    mask = jnp.asarray(mask)
    h = data.reshape(batch * maxl, ninput)
    h = jnp.maximum(h @ w1 + b1, 0.0)
    h = jnp.maximum(h @ w2 + b2, 0.0)
    h = h @ w3 + b3
    h = h.reshape(batch, maxl, -1)
    h = (h * mask).sum(1)
    n = mask.sum(1) + 1e-6
    return h / n


def init_params(key, ninput, nh, nlayers):
    # nlayers = 3 -> Linear(ninput, nh), Linear(nh, nh), Linear(nh, nh)
    assert nlayers == 3
    ks = jax.random.split(key, 6)
    s1 = 1.0 / np.sqrt(ninput)
    s2 = 1.0 / np.sqrt(nh)
    w1 = jax.random.uniform(ks[0], (ninput, nh), jnp.float32, -s1, s1)
    b1 = jax.random.uniform(ks[1], (1, nh), jnp.float32, -s1, s1)
    w2 = jax.random.uniform(ks[2], (nh, nh), jnp.float32, -s2, s2)
    b2 = jax.random.uniform(ks[3], (1, nh), jnp.float32, -s2, s2)
    w3 = jax.random.uniform(ks[4], (nh, nh), jnp.float32, -s2, s2)
    b3 = jax.random.uniform(ks[5], (1, nh), jnp.float32, -s2, s2)
    return (w1, b1, w2, b2, w3, b3)


if __name__ == "__main__":
    ninput, nh, nlayers = 32, 32, 3

    key = jax.random.PRNGKey(0)
    pkey, dkey = jax.random.split(key)
    params = init_params(pkey, ninput, nh, nlayers)

    # bf16 MXU operands -> relaxed tolerance vs. the f32 reference
    RTOL, ATOL = 3e-2, 3e-2

    # --- case 1: small batch (2 variable-length sets, lengths 5 and 8) ---
    d0, d1 = jax.random.split(dkey)
    fvs = [
        jax.random.normal(d0, (5, ninput), jnp.float32),
        jax.random.normal(d1, (8, ninput), jnp.float32),
    ]
    out = jax.block_until_ready(encoder_forward(fvs, params))
    ref = encoder_reference(fvs, params)
    np.testing.assert_allclose(np.asarray(out), np.asarray(ref), rtol=RTOL, atol=ATOL)

    # --- case 2: larger ragged batch -> multi-step grid (20 samples, auto tile_b=8 -> grid=3) ---
    lengths2 = [3, 7, 1, 11, 8, 5, 2, 9, 6, 4, 10, 7, 3, 8, 12, 1, 5, 9, 2, 6]
    keys2 = jax.random.split(jax.random.PRNGKey(1), len(lengths2))
    fvs2 = [jax.random.normal(k, (l, ninput), jnp.float32)
            for k, l in zip(keys2, lengths2)]
    out2 = jax.block_until_ready(encoder_forward(fvs2, params))
    ref2 = encoder_reference(fvs2, params)
    np.testing.assert_allclose(np.asarray(out2), np.asarray(ref2), rtol=RTOL, atol=ATOL)

    print("KERNEL_OK")
</pallas_src>

<mosaic_0001>
module attributes {stable_mosaic.version = 11 : i64} {
  func.func @encoder_kernel(%arg0: i32, %arg1: memref<64x32xbf16, #tpu.memory_space<vmem>>, %arg2: memref<8x1xi32, #tpu.memory_space<vmem>>, %arg3: memref<32x128xbf16, #tpu.memory_space<vmem>>, %arg4: memref<1x128xf32, #tpu.memory_space<vmem>>, %arg5: memref<128x128xbf16, #tpu.memory_space<vmem>>, %arg6: memref<1x128xf32, #tpu.memory_space<vmem>>, %arg7: memref<128x128xbf16, #tpu.memory_space<vmem>>, %arg8: memref<1x128xf32, #tpu.memory_space<vmem>>, %arg9: memref<8x128xf32, #tpu.memory_space<vmem>>) attributes {dimension_semantics = [#tpu.dimension_semantics<parallel>], iteration_bounds = array<i64: 1>, scalar_prefetch = 0 : i64, scratch_operands = 0 : i64, tpu.core_type = #tpu.core_type<tc>, window_params = [{transform_indices = @transform_0, window_bounds = array<i64: 64, 32>}, {transform_indices = @transform_1, window_bounds = array<i64: 8, 1>}, {pipeline_mode = #tpu.pipeline_mode<synchronous>, transform_indices = @transform_2, window_bounds = array<i64: 32, 128>}, {pipeline_mode = #tpu.pipeline_mode<synchronous>, transform_indices = @transform_3, window_bounds = array<i64: 1, 128>}, {pipeline_mode = #tpu.pipeline_mode<synchronous>, transform_indices = @transform_4, window_bounds = array<i64: 128, 128>}, {pipeline_mode = #tpu.pipeline_mode<synchronous>, transform_indices = @transform_5, window_bounds = array<i64: 1, 128>}, {pipeline_mode = #tpu.pipeline_mode<synchronous>, transform_indices = @transform_6, window_bounds = array<i64: 128, 128>}, {pipeline_mode = #tpu.pipeline_mode<synchronous>, transform_indices = @transform_7, window_bounds = array<i64: 1, 128>}, {transform_indices = @transform_8, window_bounds = array<i64: 8, 128>}]} {
    %c0 = arith.constant 0 : index
    %c0_0 = arith.constant 0 : index
    %0 = vector.load %arg1[%c0, %c0_0] : memref<64x32xbf16, #tpu.memory_space<vmem>>, vector<64x32xbf16>
    %c0_1 = arith.constant 0 : index
    %c0_2 = arith.constant 0 : index
    %1 = vector.load %arg3[%c0_1, %c0_2] : memref<32x128xbf16, #tpu.memory_space<vmem>>, vector<32x128xbf16>
    %cst = arith.constant dense<0.000000e+00> : vector<64x128xf32>
    %2 = tpu.matmul %0, %1, %cst {dimension_numbers = #tpu.dot_dimension_numbers<[1], [0], [0], [1], [0, 0, 1, 1], [], []>} : vector<64x32xbf16>, vector<32x128xbf16>, vector<64x128xf32> -> vector<64x128xf32>
    %c0_3 = arith.constant 0 : index
    %c0_4 = arith.constant 0 : index
    %3 = vector.load %arg4[%c0_3, %c0_4] : memref<1x128xf32, #tpu.memory_space<vmem>>, vector<1x128xf32>
    %4 = vector.broadcast %3 : vector<1x128xf32> to vector<64x128xf32>
    %5 = arith.addf %2, %4 : vector<64x128xf32>
    %cst_5 = arith.constant 0.000000e+00 : f32
    %6 = vector.broadcast %cst_5 : f32 to vector<64x128xf32>
    %7 = arith.maximumf %5, %6 : vector<64x128xf32>
    %8 = arith.truncf %7 : vector<64x128xf32> to vector<64x128xbf16>
    %c0_6 = arith.constant 0 : index
    %c0_7 = arith.constant 0 : index
    %9 = vector.load %arg5[%c0_6, %c0_7] : memref<128x128xbf16, #tpu.memory_space<vmem>>, vector<128x128xbf16>
    %cst_8 = arith.constant dense<0.000000e+00> : vector<64x128xf32>
    %10 = tpu.matmul %8, %9, %cst_8 {dimension_numbers = #tpu.dot_dimension_numbers<[1], [0], [0], [1], [0, 0, 1, 1], [], []>} : vector<64x128xbf16>, vector<128x128xbf16>, vector<64x128xf32> -> vector<64x128xf32>
    %c0_9 = arith.constant 0 : index
    %c0_10 = arith.constant 0 : index
    %11 = vector.load %arg6[%c0_9, %c0_10] : memref<1x128xf32, #tpu.memory_space<vmem>>, vector<1x128xf32>
    %12 = vector.broadcast %11 : vector<1x128xf32> to vector<64x128xf32>
    %13 = arith.addf %10, %12 : vector<64x128xf32>
    %cst_11 = arith.constant 0.000000e+00 : f32
    %14 = vector.broadcast %cst_11 : f32 to vector<64x128xf32>
    %15 = arith.maximumf %13, %14 : vector<64x128xf32>
    %16 = arith.truncf %15 : vector<64x128xf32> to vector<64x128xbf16>
    %c0_12 = arith.constant 0 : index
    %c0_13 = arith.constant 0 : index
    %17 = vector.load %arg7[%c0_12, %c0_13] : memref<128x128xbf16, #tpu.memory_space<vmem>>, vector<128x128xbf16>
    %cst_14 = arith.constant dense<0.000000e+00> : vector<64x128xf32>
    %18 = tpu.matmul %16, %17, %cst_14 {dimension_numbers = #tpu.dot_dimension_numbers<[1], [0], [0], [1], [0, 0, 1, 1], [], []>} : vector<64x128xbf16>, vector<128x128xbf16>, vector<64x128xf32> -> vector<64x128xf32>
    %c0_15 = arith.constant 0 : index
    %c0_16 = arith.constant 0 : index
    %19 = vector.load %arg8[%c0_15, %c0_16] : memref<1x128xf32, #tpu.memory_space<vmem>>, vector<1x128xf32>
    %20 = vector.broadcast %19 : vector<1x128xf32> to vector<64x128xf32>
    %21 = arith.addf %18, %20 : vector<64x128xf32>
    %c0_17 = arith.constant 0 : index
    %c0_18 = arith.constant 0 : index
    %22 = vector.load %arg2[%c0_17, %c0_18] : memref<8x1xi32, #tpu.memory_space<vmem>>, vector<8x1xi32>
    %23 = tpu.iota {dimensions = array<i32: 1>} : vector<8x8x1xi32>
    %24 = vector.shape_cast %22 : vector<8x1xi32> to vector<8x1x1xi32>
    %25 = vector.broadcast %24 : vector<8x1x1xi32> to vector<8x8x1xi32>
    %26 = arith.cmpi slt, %23, %25 : vector<8x8x1xi32>
    %27 = arith.extui %26 : vector<8x8x1xi1> to vector<8x8x1xi32>
    %28 = arith.sitofp %27 : vector<8x8x1xi32> to vector<8x8x1xf32>
    %29 = vector.shape_cast %21 : vector<64x128xf32> to vector<8x8x128xf32>
    %30 = vector.broadcast %28 : vector<8x8x1xf32> to vector<8x8x128xf32>
    %31 = arith.mulf %29, %30 : vector<8x8x128xf32>
    %cst_19 = arith.constant dense<0.000000e+00> : vector<8x128xf32>
    %32 = vector.multi_reduction <add>, %31, %cst_19 [1] : vector<8x8x128xf32> to vector<8x128xf32>
    %33 = arith.sitofp %22 : vector<8x1xi32> to vector<8x1xf32>
    %cst_20 = arith.constant 9.99999997E-7 : f32
    %34 = vector.broadcast %cst_20 : f32 to vector<8x1xf32>
    %35 = arith.addf %33, %34 : vector<8x1xf32>
    %36 = tpu.reciprocal %35 : vector<8x1xf32> -> vector<8x1xf32>
    %37 = vector.broadcast %36 : vector<8x1xf32> to vector<8x128xf32>
    %38 = arith.mulf %32, %37 : vector<8x128xf32>
    %c0_21 = arith.constant 0 : index
    %c0_22 = arith.constant 0 : index
    %39 = vector.load %arg9[%c0_21, %c0_22] : memref<8x128xf32, #tpu.memory_space<vmem>>, vector<8x128xf32>
    tpu.vector_store %arg9[%c0_21, %c0_22], %38 {strides = array<i32>} : memref<8x128xf32, #tpu.memory_space<vmem>>, vector<8x128xf32>,
    return
  }
  func.func @transform_0(%arg0: i32) -> (i32, i32) {
    %c0_i32 = arith.constant 0 : i32
    %c0_i32_0 = arith.constant 0 : i32
    return %arg0, %c0_i32 : i32, i32
  }
  func.func @transform_1(%arg0: i32) -> (i32, i32) {
    %c0_i32 = arith.constant 0 : i32
    %c0_i32_0 = arith.constant 0 : i32
    return %arg0, %c0_i32 : i32, i32
  }
  func.func @transform_2(%arg0: i32) -> (i32, i32) {
    %c0_i32 = arith.constant 0 : i32
    %c0_i32_0 = arith.constant 0 : i32
    %c0_i32_1 = arith.constant 0 : i32
    return %c0_i32, %c0_i32_0 : i32, i32
  }
  func.func @transform_3(%arg0: i32) -> (i32, i32) {
    %c0_i32 = arith.constant 0 : i32
    %c0_i32_0 = arith.constant 0 : i32
    %c0_i32_1 = arith.constant 0 : i32
    return %c0_i32, %c0_i32_0 : i32, i32
  }
  func.func @transform_4(%arg0: i32) -> (i32, i32) {
    %c0_i32 = arith.constant 0 : i32
    %c0_i32_0 = arith.constant 0 : i32
    %c0_i32_1 = arith.constant 0 : i32
    return %c0_i32, %c0_i32_0 : i32, i32
  }
  func.func @transform_5(%arg0: i32) -> (i32, i32) {
    %c0_i32 = arith.constant 0 : i32
    %c0_i32_0 = arith.constant 0 : i32
    %c0_i32_1 = arith.constant 0 : i32
    return %c0_i32, %c0_i32_0 : i32, i32
  }
  func.func @transform_6(%arg0: i32) -> (i32, i32) {
    %c0_i32 = arith.constant 0 : i32
    %c0_i32_0 = arith.constant 0 : i32
    %c0_i32_1 = arith.constant 0 : i32
    return %c0_i32, %c0_i32_0 : i32, i32
  }
  func.func @transform_7(%arg0: i32) -> (i32, i32) {
    %c0_i32 = arith.constant 0 : i32
    %c0_i32_0 = arith.constant 0 : i32
    %c0_i32_1 = arith.constant 0 : i32
    return %c0_i32, %c0_i32_0 : i32, i32
  }
  func.func @transform_8(%arg0: i32) -> (i32, i32) {
    %c0_i32 = arith.constant 0 : i32
    %c0_i32_0 = arith.constant 0 : i32
    return %arg0, %c0_i32 : i32, i32
  }
}

</mosaic_0001>

<llo_original>
// kernel: encoder_pallas.1
$region0: #{encoder_pallas.1}
  #allocation0 [shape = 'u32[]', space=smem, size = 0x4, offset = 0x4, fixed_abs, tag = 'smem constant byte address 0x4 - core index']
  #allocation1 [shape = 'u32[144,128]{1,0:T(1,128)}', space=vmem, size = 0x12000, scoped, tag = 'internal scratch']
  %s0 = inlined_call_operand.vmem [shape: bf16[64,32], index: 0, kind: input, shape index: {}]
  %s1 = inlined_call_operand.vmem [shape: s32[8,1], index: 1, kind: input, shape index: {}]
  %s2 = inlined_call_operand.hbm [shape: bf16[32,128], index: 2, kind: input, shape index: {}]
  %s3 = inlined_call_operand.vmem [shape: f32[1,128], index: 3, kind: input, shape index: {}]
  %s4 = inlined_call_operand.vmem [shape: bf16[128,128], index: 4, kind: input, shape index: {}]
  %s5 = inlined_call_operand.vmem [shape: f32[1,128], index: 5, kind: input, shape index: {}]
  %s6 = inlined_call_operand.hbm [shape: bf16[128,128], index: 6, kind: input, shape index: {}]
  %s7 = inlined_call_operand.vmem [shape: f32[1,128], index: 7, kind: input, shape index: {}]
  %s8 = inlined_call_operand.hbm [shape: f32[8,128], index: 8, kind: output, shape index: {}]
  %s9 = sld [smem:[#allocation0]]
  $region50: #{encoder_pallas.1} parent=0
    _
  %s11 = ssub.s32 1, %s9
  %s12 = scalar_select 0, %s11, %s9
  $region1: #{encoder_pallas.1} parent=0
    #allocation2 [shape = 'u8[8192]{0}', space=vmem, size = 0x2000, scoped, tag = 'input window, operand 2, single buffered']
    #allocation3 [shape = 's32[1]{0}', space=sflag, size = 0x4, scoped, tag = 'scoped memory for encoder_pallas.1']
    #allocation4 [shape = 's32[1]{0}', space=sflag, size = 0x4, scoped, tag = 'scoped memory for encoder_pallas.1']
    #allocation5 [shape = 'u8[32768]{0}', space=vmem, size = 0x8000, scoped, tag = 'input window, operand 6, single buffered']
    #allocation6 [shape = 's32[1]{0}', space=sflag, size = 0x4, scoped, tag = 'scoped memory for encoder_pallas.1']
    #allocation7 [shape = 'u8[4096]{0}', space=vmem, size = 0x1000, scoped, tag = 'output window, operand 0, single buffered']
    %13 = vsyncpa [#allocation3], 0
    %14 = vsyncpa [#allocation6], 0
    %15 = vsyncpa [#allocation4], 0
    // Predicated region
    $region2: #{encoder_pallas.1} parent=1 // pred_check
      _
    $region3: #{encoder_pallas.1} parent=1 // pred_check_branch
      %17 = sbr.rel (0) target = $region5
    $region4: #{encoder_pallas.1} parent=1 // pred_region
      _
    $region5: #{encoder_pallas.1} parent=1 // pred_fallthru
      _
    // Predicated region
    $region6: #{encoder_pallas.1} parent=1 // pred_check
      _
    $region7: #{encoder_pallas.1} parent=1 // pred_check_branch
      %19 = sbr.rel (0) target = $region9
    $region8: #{encoder_pallas.1} parent=1 // pred_region
      _
    $region9: #{encoder_pallas.1} parent=1 // pred_fallthru
      _
    // Predicated region
    $region10: #{encoder_pallas.1} parent=1 // pred_check
      _
    $region11: #{encoder_pallas.1} parent=1 // pred_check_branch
      %21 = sbr.rel (0) target = $region13
    $region12: #{encoder_pallas.1} parent=1 // pred_region
      %s23 = ssub.s32 256, 256
      %24 = vsyncadd [#allocation3], %s23
      %s25 = sshll.u32 [#allocation2], 4
      %s26 = int_to_ptr.vmem [resolvable:$true] %s25
      %31 = dma.hbm_to_vmem [thread:$0]  %s2, 256, %s26, [#allocation3], 64, 64, 4
    $region13: #{encoder_pallas.1} parent=1 // pred_fallthru
      _
    // Predicated region
    $region14: #{encoder_pallas.1} parent=1 // pred_check
      _
    $region15: #{encoder_pallas.1} parent=1 // pred_check_branch
      %33 = sbr.rel (0) target = $region17
    $region16: #{encoder_pallas.1} parent=1 // pred_region
      _
    $region17: #{encoder_pallas.1} parent=1 // pred_fallthru
      _
    // Predicated region
    $region18: #{encoder_pallas.1} parent=1 // pred_check
      _
    $region19: #{encoder_pallas.1} parent=1 // pred_check_branch
      %35 = sbr.rel (0) target = $region21
    $region20: #{encoder_pallas.1} parent=1 // pred_region
      _
    $region21: #{encoder_pallas.1} parent=1 // pred_fallthru
      _
    // Predicated region
    $region22: #{encoder_pallas.1} parent=1 // pred_check
      _
    $region23: #{encoder_pallas.1} parent=1 // pred_check_branch
      %37 = sbr.rel (0) target = $region25
    $region24: #{encoder_pallas.1} parent=1 // pred_region
      _
    $region25: #{encoder_pallas.1} parent=1 // pred_fallthru
      _
    // Predicated region
    $region26: #{encoder_pallas.1} parent=1 // pred_check
      _
    $region27: #{encoder_pallas.1} parent=1 // pred_check_branch
      %39 = sbr.rel (0) target = $region29
    $region28: #{encoder_pallas.1} parent=1 // pred_region
      %s41 = ssub.s32 1024, 1024
      %42 = vsyncadd [#allocation6], %s41
      %s43 = sshll.u32 [#allocation5], 4
      %s44 = int_to_ptr.vmem [resolvable:$true] %s43
      %49 = dma.hbm_to_vmem [thread:$0]  %s6, 1024, %s44, [#allocation6], 64, 64, 4
    $region29: #{encoder_pallas.1} parent=1 // pred_fallthru
      _
    // Predicated region
    $region30: #{encoder_pallas.1} parent=1 // pred_check
      _
    $region31: #{encoder_pallas.1} parent=1 // pred_check_branch
      %51 = sbr.rel (0) target = $region33
    $region32: #{encoder_pallas.1} parent=1 // pred_region
      _
    $region33: #{encoder_pallas.1} parent=1 // pred_fallthru
      _
    // Predicated region
    $region34: #{encoder_pallas.1} parent=1 // pred_check
      _
    $region35: #{encoder_pallas.1} parent=1 // pred_check_branch
      %53 = sbr.rel (0) target = $region37
    $region36: #{encoder_pallas.1} parent=1 // pred_region
      %54 = dma.done [#allocation3], 256
    $region37: #{encoder_pallas.1} parent=1 // pred_fallthru
      _
    // Predicated region
    $region38: #{encoder_pallas.1} parent=1 // pred_check
      _
    $region39: #{encoder_pallas.1} parent=1 // pred_check_branch
      %56 = sbr.rel (0) target = $region41
    $region40: #{encoder_pallas.1} parent=1 // pred_region
      %57 = dma.done [#allocation6], 1024
    $region41: #{encoder_pallas.1} parent=1 // pred_fallthru
      _
    %v59 = vld [vmem:[%s0] sm:$0xf]
    %v60 = vld [vmem:[%s0 + $0x4] sm:$0xf]
    %v61 = vld [vmem:[%s0 + $0x8] sm:$0xf]
    %v62 = vld [vmem:[%s0 + $0xc] sm:$0xf]
    %v63 = vld [vmem:[%s0 + $0x10] sm:$0xf]
    %v64 = vld [vmem:[%s0 + $0x14] sm:$0xf]
    %v65 = vld [vmem:[%s0 + $0x18] sm:$0xf]
    %v66 = vld [vmem:[%s0 + $0x1c] sm:$0xf]
    %v67 = vld [vmem:[#allocation2] sm:$0xf]
    %v68 = vld [vmem:[#allocation2 + $0x4] sm:$0xf]
    %v69 = vld [vmem:[#allocation2 + $0x8] sm:$0xf]
    %v70 = vld [vmem:[#allocation2 + $0xc] sm:$0xf]
    %v71 = vld [vmem:[%s3] sm:$0x1]
    %v73 = vlaneseq
    %v74 = vshrl.u32 %v73, 7
    %v75 = vsub.s32 0, %v74
    %v76 = vrot.slane %v71, %v75
    %v86 = vunpack.c.l.b16 %v59
    %v87 = vunpack.c.l.b16 %v60
    %v88 = vunpack.c.l.b16 %v61
    %v89 = vunpack.c.l.b16 %v62
    %v90 = vunpack.c.l.b16 %v63
    %v91 = vunpack.c.l.b16 %v64
    %v92 = vunpack.c.l.b16 %v65
    %v93 = vunpack.c.l.b16 %v66
    %v94 = vpack.c.b16 %v87, %v86
    %v95 = vpack.c.b16 %v89, %v88
    %v96 = vpack.c.b16 %v91, %v90
    %v97 = vpack.c.b16 %v93, %v92
    %v102 = vunpack.c.l.b16 %v67
    %v103 = vunpack.c.l.b16 %v68
    %v104 = vunpack.c.l.b16 %v69
    %v105 = vunpack.c.l.b16 %v70
    %v106 = vpack.c.b16 %v103, %v102
    %v107 = vpack.c.b16 %v105, %v104
    %vm110 = vcmask 261120
    %v112 = vsel %vm110, %v94, 0
    %v115 = vsel %vm110, %v95, 0
    %v118 = vsel %vm110, %v96, 0
    %v121 = vsel %vm110, %v97, 0
    %123 = vmatprep.subr.bf16.mxu0 0
    %124 = vmatpush1.bf16.msra.mxu0 %v106
    %125 = vmatprep.subr.bf16.mxu0 0
    %126 = vmatpush1.bf16.msra.mxu0 %v107
    %127 = vmatprep.subr.bf16.mxu0 0
    %128 = vmatpush1.bf16.msra.mxu0 0
    %129 = vmatprep.subr.bf16.mxu0 0
    %130 = vmatpush1.bf16.msra.mxu0 0
    %131 = vmatprep.subr.bf16.mxu0 0
    %132 = vmatpush1.bf16.msra.mxu0 0
    %133 = vmatprep.subr.bf16.mxu0 0
    %134 = vmatpush1.bf16.msra.mxu0 0
    %135 = vmatprep.subr.bf16.mxu0 0
    %136 = vmatpush1.bf16.msra.mxu0 0
    %137 = vmatprep.subr.bf16.mxu0 0
    %138 = vmatpush1.bf16.msra.mxu0 0
    %139 = vmatprep.subr.bf16.mxu0 0
    %140 = vmatpush1.bf16.msra.mxu0 0
    %141 = vmatprep.subr.bf16.mxu0 0
    %142 = vmatpush1.bf16.msra.mxu0 0
    %143 = vmatprep.subr.bf16.mxu0 0
    %144 = vmatpush1.bf16.msra.mxu0 0
    %145 = vmatprep.subr.bf16.mxu0 0
    %146 = vmatpush1.bf16.msra.mxu0 0
    %147 = vmatprep.subr.bf16.mxu0 0
    %148 = vmatpush1.bf16.msra.mxu0 0
    %149 = vmatprep.subr.bf16.mxu0 0
    %150 = vmatpush1.bf16.msra.mxu0 0
    %151 = vmatprep.subr.bf16.mxu0 0
    %152 = vmatpush1.bf16.msra.mxu0 0
    %153 = vmatprep.subr.bf16.mxu0 0
    %154 = vmatpush1.bf16.msra.mxu0 0
    %155 = vmatprep.mubr.bf16.mxu0 0
    %156 = vmatmul.mubr.bf16.gmra.mrb[0].mxu0 %v112
    %v157 = vpop.f32.mrb[0].mxu0
    %v158 = vadd.f32 %v76, %v157
    %v159 = vpop.f32.mrb[0].mxu0
    %v160 = vpop.f32.mrb[0].mxu0
    %v161 = vadd.f32 %v76, %v160
    %v162 = vpop.f32.mrb[0].mxu0
    %163 = vmatprep.mubr.bf16.mxu0 0
    %164 = vmatmul.mubr.bf16.gmra.mrb[0].mxu0 %v115
    %v165 = vpop.f32.mrb[0].mxu0
    %v166 = vadd.f32 %v76, %v165
    %v167 = vpop.f32.mrb[0].mxu0
    %v168 = vpop.f32.mrb[0].mxu0
    %v169 = vadd.f32 %v76, %v168
    %v170 = vpop.f32.mrb[0].mxu0
    %171 = vmatprep.mubr.bf16.mxu0 0
    %172 = vmatmul.mubr.bf16.gmra.mrb[0].mxu0 %v118
    %v173 = vpop.f32.mrb[0].mxu0
    %v174 = vadd.f32 %v76, %v173
    %v175 = vpop.f32.mrb[0].mxu0
    %v176 = vpop.f32.mrb[0].mxu0
    %v177 = vadd.f32 %v76, %v176
    %v178 = vpop.f32.mrb[0].mxu0
    %179 = vmatprep.mubr.bf16.mxu0 0
    %180 = vmatmul.mubr.bf16.gmra.mrb[0].mxu0 %v121
    %v181 = vpop.f32.mrb[0].mxu0
    %v182 = vadd.f32 %v76, %v181
    %v183 = vpop.f32.mrb[0].mxu0
    %v184 = vpop.f32.mrb[0].mxu0
    %v185 = vadd.f32 %v76, %v184
    %v186 = vpop.f32.mrb[0].mxu0
    %187 = vdwg.mxu0
    %v188 = vmax.f32 %v158, 0.0
    %v189 = vmax.f32 %v161, 0.0
    %v190 = vmax.f32 %v166, 0.0
    %v191 = vmax.f32 %v169, 0.0
    %v192 = vmax.f32 %v174, 0.0
    %v193 = vmax.f32 %v177, 0.0
    %v194 = vmax.f32 %v182, 0.0
    %v195 = vmax.f32 %v185, 0.0
    %v196 = vpack.c.bf16 %v189, %v188
    %v197 = vpack.c.bf16 %v191, %v190
    %v198 = vpack.c.bf16 %v193, %v192
    %v199 = vpack.c.bf16 %v195, %v194
    %v200 = vld [vmem:[%s4] sm:$0xf]
    %v201 = vld [vmem:[%s4 + $0x4] sm:$0xf]
    %v202 = vld [vmem:[%s4 + $0x8] sm:$0xf]
    %v203 = vld [vmem:[%s4 + $0xc] sm:$0xf]
    %v204 = vld [vmem:[%s4 + $0x10] sm:$0xf]
    %v205 = vld [vmem:[%s4 + $0x14] sm:$0xf]
    %v206 = vld [vmem:[%s4 + $0x18] sm:$0xf]
    %v207 = vld [vmem:[%s4 + $0x1c] sm:$0xf]
    %v208 = vld [vmem:[%s4 + $0x20] sm:$0xf]
    %v209 = vld [vmem:[%s4 + $0x24] sm:$0xf]
    %v210 = vld [vmem:[%s4 + $0x28] sm:$0xf]
    %v211 = vld [vmem:[%s4 + $0x2c] sm:$0xf]
    %v212 = vld [vmem:[%s4 + $0x30] sm:$0xf]
    %v213 = vld [vmem:[%s4 + $0x34] sm:$0xf]
    %v214 = vld [vmem:[%s4 + $0x38] sm:$0xf]
    %v215 = vld [vmem:[%s4 + $0x3c] sm:$0xf]
    %v216 = vld [vmem:[%s5] sm:$0x1]
    %v218 = vlaneseq
    %v219 = vshrl.u32 %v218, 7
    %v220 = vsub.s32 0, %v219
    %v221 = vrot.slane %v216, %v220
    %v239 = vunpack.c.l.b16 %v200
    %v240 = vunpack.c.l.b16 %v201
    %v241 = vunpack.c.l.b16 %v202
    %v242 = vunpack.c.l.b16 %v203
    %v243 = vunpack.c.l.b16 %v204
    %v244 = vunpack.c.l.b16 %v205
    %v245 = vunpack.c.l.b16 %v206
    %v246 = vunpack.c.l.b16 %v207
    %v247 = vunpack.c.l.b16 %v208
    %v248 = vunpack.c.l.b16 %v209
    %v249 = vunpack.c.l.b16 %v210
    %v250 = vunpack.c.l.b16 %v211
    %v251 = vunpack.c.l.b16 %v212
    %v252 = vunpack.c.l.b16 %v213
    %v253 = vunpack.c.l.b16 %v214
    %v254 = vunpack.c.l.b16 %v215
    %v255 = vpack.c.b16 %v240, %v239
    %v256 = vpack.c.b16 %v242, %v241
    %v257 = vpack.c.b16 %v244, %v243
    %v258 = vpack.c.b16 %v246, %v245
    %v259 = vpack.c.b16 %v248, %v247
    %v260 = vpack.c.b16 %v250, %v249
    %v261 = vpack.c.b16 %v252, %v251
    %v262 = vpack.c.b16 %v254, %v253
    %271 = vmatprep.subr.bf16.mxu0 0
    %272 = vmatpush1.bf16.msra.mxu0 %v255
    %273 = vmatprep.subr.bf16.mxu0 0
    %274 = vmatpush1.bf16.msra.mxu0 %v256
    %275 = vmatprep.subr.bf16.mxu0 0
    %276 = vmatpush1.bf16.msra.mxu0 %v257
    %277 = vmatprep.subr.bf16.mxu0 0
    %278 = vmatpush1.bf16.msra.mxu0 %v258
    %279 = vmatprep.subr.bf16.mxu0 0
    %280 = vmatpush1.bf16.msra.mxu0 %v259
    %281 = vmatprep.subr.bf16.mxu0 0
    %282 = vmatpush1.bf16.msra.mxu0 %v260
    %283 = vmatprep.subr.bf16.mxu0 0
    %284 = vmatpush1.bf16.msra.mxu0 %v261
    %285 = vmatprep.subr.bf16.mxu0 0
    %286 = vmatpush1.bf16.msra.mxu0 %v262
    %287 = vmatprep.subr.bf16.mxu0 0
    %288 = vmatpush1.bf16.msra.mxu0 0
    %289 = vmatprep.subr.bf16.mxu0 0
    %290 = vmatpush1.bf16.msra.mxu0 0
    %291 = vmatprep.subr.bf16.mxu0 0
    %292 = vmatpush1.bf16.msra.mxu0 0
    %293 = vmatprep.subr.bf16.mxu0 0
    %294 = vmatpush1.bf16.msra.mxu0 0
    %295 = vmatprep.subr.bf16.mxu0 0
    %296 = vmatpush1.bf16.msra.mxu0 0
    %297 = vmatprep.subr.bf16.mxu0 0
    %298 = vmatpush1.bf16.msra.mxu0 0
    %299 = vmatprep.subr.bf16.mxu0 0
    %300 = vmatpush1.bf16.msra.mxu0 0
    %301 = vmatprep.subr.bf16.mxu0 0
    %302 = vmatpush1.bf16.msra.mxu0 0
    %303 = vmatprep.mubr.bf16.mxu0 0
    %304 = vmatmul.mubr.bf16.gmra.mrb[0].mxu0 %v196
    %v305 = vpop.f32.mrb[0].mxu0
    %v306 = vadd.f32 %v221, %v305
    %v307 = vpop.f32.mrb[0].mxu0
    %v308 = vpop.f32.mrb[0].mxu0
    %v309 = vadd.f32 %v221, %v308
    %v310 = vpop.f32.mrb[0].mxu0
    %311 = vmatprep.mubr.bf16.mxu0 0
    %312 = vmatmul.mubr.bf16.gmra.mrb[0].mxu0 %v197
    %v313 = vpop.f32.mrb[0].mxu0
    %v314 = vadd.f32 %v221, %v313
    %v315 = vpop.f32.mrb[0].mxu0
    %v316 = vpop.f32.mrb[0].mxu0
    %v317 = vadd.f32 %v221, %v316
    %v318 = vpop.f32.mrb[0].mxu0
    %319 = vmatprep.mubr.bf16.mxu0 0
    %320 = vmatmul.mubr.bf16.gmra.mrb[0].mxu0 %v198
    %v321 = vpop.f32.mrb[0].mxu0
    %v322 = vadd.f32 %v221, %v321
    %v323 = vpop.f32.mrb[0].mxu0
    %v324 = vpop.f32.mrb[0].mxu0
    %v325 = vadd.f32 %v221, %v324
    %v326 = vpop.f32.mrb[0].mxu0
    %327 = vmatprep.mubr.bf16.mxu0 0
    %328 = vmatmul.mubr.bf16.gmra.mrb[0].mxu0 %v199
    %v329 = vpop.f32.mrb[0].mxu0
    %v330 = vadd.f32 %v221, %v329
    %v331 = vpop.f32.mrb[0].mxu0
    %v332 = vpop.f32.mrb[0].mxu0
    %v333 = vadd.f32 %v221, %v332
    %v334 = vpop.f32.mrb[0].mxu0
    %335 = vdwg.mxu0
    %v336 = vmax.f32 %v306, 0.0
    %v337 = vmax.f32 %v309, 0.0
    %v338 = vmax.f32 %v314, 0.0
    %v339 = vmax.f32 %v317, 0.0
    %v340 = vmax.f32 %v322, 0.0
    %v341 = vmax.f32 %v325, 0.0
    %v342 = vmax.f32 %v330, 0.0
    %v343 = vmax.f32 %v333, 0.0
    %v344 = vpack.c.bf16 %v337, %v336
    %v345 = vpack.c.bf16 %v339, %v338
    %v346 = vpack.c.bf16 %v341, %v340
    %v347 = vpack.c.bf16 %v343, %v342
    %v348 = vld [vmem:[#allocation5] sm:$0xf]
    %v349 = vld [vmem:[#allocation5 + $0x4] sm:$0xf]
    %v350 = vld [vmem:[#allocation5 + $0x8] sm:$0xf]
    %v351 = vld [vmem:[#allocation5 + $0xc] sm:$0xf]
    %v352 = vld [vmem:[#allocation5 + $0x10] sm:$0xf]
    %v353 = vld [vmem:[#allocation5 + $0x14] sm:$0xf]
    %v354 = vld [vmem:[#allocation5 + $0x18] sm:$0xf]
    %v355 = vld [vmem:[#allocation5 + $0x1c] sm:$0xf]
    %v356 = vld [vmem:[#allocation5 + $0x20] sm:$0xf]
    %v357 = vld [vmem:[#allocation5 + $0x24] sm:$0xf]
    %v358 = vld [vmem:[#allocation5 + $0x28] sm:$0xf]
    %v359 = vld [vmem:[#allocation5 + $0x2c] sm:$0xf]
    %v360 = vld [vmem:[#allocation5 + $0x30] sm:$0xf]
    %v361 = vld [vmem:[#allocation5 + $0x34] sm:$0xf]
    %v362 = vld [vmem:[#allocation5 + $0x38] sm:$0xf]
    %v363 = vld [vmem:[#allocation5 + $0x3c] sm:$0xf]
    %v364 = vld [vmem:[%s7] sm:$0x1]
    %v366 = vlaneseq
    %v367 = vshrl.u32 %v366, 7
    %v368 = vsub.s32 0, %v367
    %v369 = vrot.slane %v364, %v368
    %v387 = vunpack.c.l.b16 %v348
    %v388 = vunpack.c.l.b16 %v349
    %v389 = vunpack.c.l.b16 %v350
    %v390 = vunpack.c.l.b16 %v351
    %v391 = vunpack.c.l.b16 %v352
    %v392 = vunpack.c.l.b16 %v353
    %v393 = vunpack.c.l.b16 %v354
    %v394 = vunpack.c.l.b16 %v355
    %v395 = vunpack.c.l.b16 %v356
    %v396 = vunpack.c.l.b16 %v357
    %v397 = vunpack.c.l.b16 %v358
    %v398 = vunpack.c.l.b16 %v359
    %v399 = vunpack.c.l.b16 %v360
    %v400 = vunpack.c.l.b16 %v361
    %v401 = vunpack.c.l.b16 %v362
    %v402 = vunpack.c.l.b16 %v363
    %v403 = vpack.c.b16 %v388, %v387
    %v404 = vpack.c.b16 %v390, %v389
    %v405 = vpack.c.b16 %v392, %v391
    %v406 = vpack.c.b16 %v394, %v393
    %v407 = vpack.c.b16 %v396, %v395
    %v408 = vpack.c.b16 %v398, %v397
    %v409 = vpack.c.b16 %v400, %v399
    %v410 = vpack.c.b16 %v402, %v401
    %419 = vmatprep.subr.bf16.mxu0 0
    %420 = vmatpush1.bf16.msra.mxu0 %v403
    %421 = vmatprep.subr.bf16.mxu0 0
    %422 = vmatpush1.bf16.msra.mxu0 %v404
    %423 = vmatprep.subr.bf16.mxu0 0
    %424 = vmatpush1.bf16.msra.mxu0 %v405
    %425 = vmatprep.subr.bf16.mxu0 0
    %426 = vmatpush1.bf16.msra.mxu0 %v406
    %427 = vmatprep.subr.bf16.mxu0 0
    %428 = vmatpush1.bf16.msra.mxu0 %v407
    %429 = vmatprep.subr.bf16.mxu0 0
    %430 = vmatpush1.bf16.msra.mxu0 %v408
    %431 = vmatprep.subr.bf16.mxu0 0
    %432 = vmatpush1.bf16.msra.mxu0 %v409
    %433 = vmatprep.subr.bf16.mxu0 0
    %434 = vmatpush1.bf16.msra.mxu0 %v410
    %435 = vmatprep.subr.bf16.mxu0 0
    %436 = vmatpush1.bf16.msra.mxu0 0
    %437 = vmatprep.subr.bf16.mxu0 0
    %438 = vmatpush1.bf16.msra.mxu0 0
    %439 = vmatprep.subr.bf16.mxu0 0
    %440 = vmatpush1.bf16.msra.mxu0 0
    %441 = vmatprep.subr.bf16.mxu0 0
    %442 = vmatpush1.bf16.msra.mxu0 0
    %443 = vmatprep.subr.bf16.mxu0 0
    %444 = vmatpush1.bf16.msra.mxu0 0
    %445 = vmatprep.subr.bf16.mxu0 0
    %446 = vmatpush1.bf16.msra.mxu0 0
    %447 = vmatprep.subr.bf16.mxu0 0
    %448 = vmatpush1.bf16.msra.mxu0 0
    %449 = vmatprep.subr.bf16.mxu0 0
    %450 = vmatpush1.bf16.msra.mxu0 0
    %451 = vmatprep.mubr.bf16.mxu0 0
    %452 = vmatmul.mubr.bf16.gmra.mrb[0].mxu0 %v344
    %v453 = vpop.f32.mrb[0].mxu0
    %v454 = vadd.f32 %v369, %v453
    %v455 = vpop.f32.mrb[0].mxu0
    %v456 = vpop.f32.mrb[0].mxu0
    %v457 = vadd.f32 %v369, %v456
    %v458 = vpop.f32.mrb[0].mxu0
    %459 = vmatprep.mubr.bf16.mxu0 0
    %460 = vmatmul.mubr.bf16.gmra.mrb[0].mxu0 %v345
    %v461 = vpop.f32.mrb[0].mxu0
    %v462 = vadd.f32 %v369, %v461
    %v463 = vpop.f32.mrb[0].mxu0
    %v464 = vpop.f32.mrb[0].mxu0
    %v465 = vadd.f32 %v369, %v464
    %v466 = vpop.f32.mrb[0].mxu0
    %467 = vmatprep.mubr.bf16.mxu0 0
    %468 = vmatmul.mubr.bf16.gmra.mrb[0].mxu0 %v346
    %v469 = vpop.f32.mrb[0].mxu0
    %v470 = vadd.f32 %v369, %v469
    %v471 = vpop.f32.mrb[0].mxu0
    %v472 = vpop.f32.mrb[0].mxu0
    %v473 = vadd.f32 %v369, %v472
    %v474 = vpop.f32.mrb[0].mxu0
    %475 = vmatprep.mubr.bf16.mxu0 0
    %476 = vmatmul.mubr.bf16.gmra.mrb[0].mxu0 %v347
    %v477 = vpop.f32.mrb[0].mxu0
    %v478 = vadd.f32 %v369, %v477
    %v479 = vpop.f32.mrb[0].mxu0
    %v480 = vpop.f32.mrb[0].mxu0
    %v481 = vadd.f32 %v369, %v480
    %v482 = vpop.f32.mrb[0].mxu0
    %483 = vdwg.mxu0
    %v484 = vld [vmem:[%s1] sm:$0xff]
    %v485 = vlaneseq
    %v486 = vshrl.u32 %v485, 7
    %v487 = vcombine.high %v484, %v484
    %v489 = vunpack.c.l.s4 1966171168
    %v490 = vunpack.c.0.s8 %v489
    %v491 = vlaneseq
    %v492 = vshrl.u32 %v491, 7
    %v493 = vsub.s32 %v490, %v492
    %v494 = vrot.slane %v484, %v493
    %v496 = vunpack.c.l.s4 1966171168
    %v497 = vunpack.c.0.s8 %v496
    %v498 = vlaneseq
    %v499 = vshrl.u32 %v498, 7
    %v500 = vsub.s32 %v497, %v499
    %v501 = vrot.slane %v487, %v500
    %v502 = vcombine.high %v494, %v494
    %v503 = vcombine.high %v501, %v501
    %v505 = vunpack.c.l.s4 1966171168
    %v506 = vunpack.c.0.s8 %v505
    %v507 = vlaneseq
    %v508 = vshrl.u32 %v507, 7
    %v509 = vsub.s32 %v506, %v508
    %v510 = vrot.slane %v494, %v509
    %v512 = vunpack.c.l.s4 1966171168
    %v513 = vunpack.c.0.s8 %v512
    %v514 = vlaneseq
    %v515 = vshrl.u32 %v514, 7
    %v516 = vsub.s32 %v513, %v515
    %v517 = vrot.slane %v501, %v516
    %v519 = vunpack.c.l.s4 1966171168
    %v520 = vunpack.c.0.s8 %v519
    %v521 = vlaneseq
    %v522 = vshrl.u32 %v521, 7
    %v523 = vsub.s32 %v520, %v522
    %v524 = vrot.slane %v502, %v523
    %v526 = vunpack.c.l.s4 1966171168
    %v527 = vunpack.c.0.s8 %v526
    %v528 = vlaneseq
    %v529 = vshrl.u32 %v528, 7
    %v530 = vsub.s32 %v527, %v529
    %v531 = vrot.slane %v503, %v530
    %v532 = vcombine.high %v510, %v510
    %v533 = vcombine.high %v517, %v517
    %v534 = vcombine.high %v524, %v524
    %v535 = vcombine.high %v531, %v531
    %v536 = vlaneseq
    %v537 = vshrl.u32 %v536, 7
    %v538 = vsub.s32 0, %v537
    %v539 = vrot.slane %v510, %v538
    %v540 = vlaneseq
    %v541 = vshrl.u32 %v540, 7
    %v542 = vsub.s32 0, %v541
    %v543 = vrot.slane %v524, %v542
    %v544 = vlaneseq
    %v545 = vshrl.u32 %v544, 7
    %v546 = vsub.s32 0, %v545
    %v547 = vrot.slane %v532, %v546
    %v548 = vlaneseq
    %v549 = vshrl.u32 %v548, 7
    %v550 = vsub.s32 0, %v549
    %v551 = vrot.slane %v534, %v550
    %v552 = vlaneseq
    %v553 = vshrl.u32 %v552, 7
    %v554 = vsub.s32 0, %v553
    %v555 = vrot.slane %v517, %v554
    %v556 = vlaneseq
    %v557 = vshrl.u32 %v556, 7
    %v558 = vsub.s32 0, %v557
    %v559 = vrot.slane %v531, %v558
    %v560 = vlaneseq
    %v561 = vshrl.u32 %v560, 7
    %v562 = vsub.s32 0, %v561
    %v563 = vrot.slane %v533, %v562
    %v564 = vlaneseq
    %v565 = vshrl.u32 %v564, 7
    %v566 = vsub.s32 0, %v565
    %v567 = vrot.slane %v535, %v566
    %vm568 = vcmp.lt.s32.totalorder %v486, %v539
    %vm569 = vcmp.lt.s32.totalorder %v486, %v543
    %vm570 = vcmp.lt.s32.totalorder %v486, %v547
    %vm571 = vcmp.lt.s32.totalorder %v486, %v551
    %vm572 = vcmp.lt.s32.totalorder %v486, %v555
    %vm573 = vcmp.lt.s32.totalorder %v486, %v559
    %vm574 = vcmp.lt.s32.totalorder %v486, %v563
    %vm575 = vcmp.lt.s32.totalorder %v486, %v567
    %v576 = vsel %vm568, 1, 0
    %v577 = vsel %vm569, 1, 0
    %v578 = vsel %vm570, 1, 0
    %v579 = vsel %vm571, 1, 0
    %v580 = vsel %vm572, 1, 0
    %v581 = vsel %vm573, 1, 0
    %v582 = vsel %vm574, 1, 0
    %v583 = vsel %vm575, 1, 0
    %v584 = vcvt.s32.f32 %v576
    %v585 = vcvt.s32.f32 %v577
    %v586 = vcvt.s32.f32 %v578
    %v587 = vcvt.s32.f32 %v579
    %v588 = vcvt.s32.f32 %v580
    %v589 = vcvt.s32.f32 %v581
    %v590 = vcvt.s32.f32 %v582
    %v591 = vcvt.s32.f32 %v583
    %593 = vset.pattern.permute.xlu0 0
    %594 = vperm.xlu0 %593, %v584
    %v595 = vpop.permute.xlu0 %594
    %598 = vset.pattern.permute.xlu0 0
    %599 = vperm.xlu0 %598, %v585
    %v600 = vpop.permute.xlu0 %599
    %603 = vset.pattern.permute.xlu0 0
    %604 = vperm.xlu0 %603, %v586
    %v605 = vpop.permute.xlu0 %604
    %608 = vset.pattern.permute.xlu0 0
    %609 = vperm.xlu0 %608, %v587
    %v610 = vpop.permute.xlu0 %609
    %613 = vset.pattern.permute.xlu0 0
    %614 = vperm.xlu0 %613, %v588
    %v615 = vpop.permute.xlu0 %614
    %618 = vset.pattern.permute.xlu0 0
    %619 = vperm.xlu0 %618, %v589
    %v620 = vpop.permute.xlu0 %619
    %623 = vset.pattern.permute.xlu0 0
    %624 = vperm.xlu0 %623, %v590
    %v625 = vpop.permute.xlu0 %624
    %628 = vset.pattern.permute.xlu0 0
    %629 = vperm.xlu0 %628, %v591
    %v630 = vpop.permute.xlu0 %629
    %v632 = vmul.f32 %v454, %v595
    %v633 = vmul.f32 %v457, %v600
    %v634 = vmul.f32 %v462, %v605
    %v635 = vmul.f32 %v465, %v610
    %v636 = vmul.f32 %v470, %v615
    %v637 = vmul.f32 %v473, %v620
    %v638 = vmul.f32 %v478, %v625
    %v639 = vmul.f32 %v481, %v630
    %v640 = vrot.slane %v632, 4
    %v641 = vadd.f32 %v632, %v640
    %v642 = vrot.slane %v641, 2
    %v643 = vadd.f32 %v641, %v642
    %v644 = vrot.slane %v643, 1
    %v645 = vadd.f32 %v643, %v644
    %v646 = vrot.slane %v633, 4
    %v647 = vadd.f32 %v633, %v646
    %v648 = vrot.slane %v647, 2
    %v649 = vadd.f32 %v647, %v648
    %v650 = vrot.slane %v649, 1
    %v651 = vadd.f32 %v649, %v650
    %v652 = vrot.slane %v634, 4
    %v653 = vadd.f32 %v634, %v652
    %v654 = vrot.slane %v653, 2
    %v655 = vadd.f32 %v653, %v654
    %v656 = vrot.slane %v655, 1
    %v657 = vadd.f32 %v655, %v656
    %v658 = vrot.slane %v635, 4
    %v659 = vadd.f32 %v635, %v658
    %v660 = vrot.slane %v659, 2
    %v661 = vadd.f32 %v659, %v660
    %v662 = vrot.slane %v661, 1
    %v663 = vadd.f32 %v661, %v662
    %v664 = vrot.slane %v636, 4
    %v665 = vadd.f32 %v636, %v664
    %v666 = vrot.slane %v665, 2
    %v667 = vadd.f32 %v665, %v666
    %v668 = vrot.slane %v667, 1
    %v669 = vadd.f32 %v667, %v668
    %v670 = vrot.slane %v637, 4
    %v671 = vadd.f32 %v637, %v670
    %v672 = vrot.slane %v671, 2
    %v673 = vadd.f32 %v671, %v672
    %v674 = vrot.slane %v673, 1
    %v675 = vadd.f32 %v673, %v674
    %v676 = vrot.slane %v638, 4
    %v677 = vadd.f32 %v638, %v676
    %v678 = vrot.slane %v677, 2
    %v679 = vadd.f32 %v677, %v678
    %v680 = vrot.slane %v679, 1
    %v681 = vadd.f32 %v679, %v680
    %v682 = vrot.slane %v639, 4
    %v683 = vadd.f32 %v639, %v682
    %v684 = vrot.slane %v683, 2
    %v685 = vadd.f32 %v683, %v684
    %v686 = vrot.slane %v685, 1
    %v687 = vadd.f32 %v685, %v686
    %v688 = vcvt.s32.f32 %v484
    %v689 = vadd.f32 %v688, 1e-06
    %v690 = vrcp.pop %v689
    %692 = vset.pattern.permute.xlu0 0
    %693 = vperm.xlu0 %692, %v690
    %v694 = vpop.permute.xlu0 %693
    %v695 = vrot.slane %v694, 1
    %v696 = vrot.slane %v694, 2
    %v697 = vrot.slane %v694, 3
    %v698 = vrot.slane %v694, 4
    %v699 = vrot.slane %v694, 5
    %v700 = vrot.slane %v694, 6
    %v701 = vrot.slane %v694, 7
    %v710 = vmul.f32 %v645, %v694
    %v711 = vmul.f32 %v651, %v695
    %v712 = vmul.f32 %v657, %v696
    %v713 = vmul.f32 %v663, %v697
    %v714 = vmul.f32 %v669, %v698
    %v715 = vmul.f32 %v675, %v699
    %v716 = vmul.f32 %v681, %v700
    %v717 = vmul.f32 %v687, %v701
    %v726 = vrot.slane %v711, 7
    %vm727 = vcmask 1041409
    %v728 = vsel %vm727, %v726, %v710
    %v729 = vrot.slane %v712, 6
    %vm730 = vcmask 1042434
    %v731 = vsel %vm730, %v729, %v728
    %v732 = vrot.slane %v713, 5
    %vm733 = vcmask 1043459
    %v734 = vsel %vm733, %v732, %v731
    %v735 = vrot.slane %v714, 4
    %vm736 = vcmask 1044484
    %v737 = vsel %vm736, %v735, %v734
    %v738 = vrot.slane %v715, 3
    %vm739 = vcmask 1045509
    %v740 = vsel %vm739, %v738, %v737
    %v741 = vrot.slane %v716, 2
    %vm742 = vcmask 1046534
    %v743 = vsel %vm742, %v741, %v740
    %v744 = vrot.slane %v717, 1
    %vm745 = vcmask 1047559
    %v746 = vsel %vm745, %v744, %v743
    %748 = vst [vmem:[#allocation7] sm:$0xff] %v746
    // Predicated region
    $region42: #{encoder_pallas.1} parent=1 // pred_check
      _
    $region43: #{encoder_pallas.1} parent=1 // pred_check_branch
      %750 = sbr.rel (0) target = $region45
    $region44: #{encoder_pallas.1} parent=1 // pred_region
      %s752 = ssub.s32 128, 128
      %753 = vsyncadd [#allocation4], %s752
      %s755 = sshll.u32 [#allocation7], 4
      %s756 = int_to_ptr.vmem [resolvable:$true] %s755
      %758 = dma.vmem_to_hbm [thread:$0]  %s756, 128, %s8, [#allocation4]
    $region45: #{encoder_pallas.1} parent=1 // pred_fallthru
      _
    // Predicated region
    $region46: #{encoder_pallas.1} parent=1 // pred_check
      _
    $region47: #{encoder_pallas.1} parent=1 // pred_check_branch
      %760 = sbr.rel (0) target = $region49
    $region48: #{encoder_pallas.1} parent=1 // pred_region
      %761 = dma.done [#allocation4], 128
    $region49: #{encoder_pallas.1} parent=1 // pred_fallthru
      _
    %762 = vsyncpa [#allocation3], 1
    %763 = vsyncpa [#allocation6], 1
    %764 = vsyncpa [#allocation4], 1

</llo_original>
